<compile_context>
chip_gen: v7x
topology: tpu7x:2x2x1
jax: 0.10.0
libtpu: 0.0.40
codegen_flags: <defaults>
</compile_context>

<pallas_src>
import math

import jax
import jax.numpy as jnp
from jax.experimental import pallas as pl
from jax.experimental.pallas import tpu as pltpu


def _copy_kernel(x_ref, o_ref):
    # Pure pass-through: squeeze/view is shape metadata; the kernel just
    # streams each lane-dense tile through VMEM unchanged.
    o_ref[...] = x_ref[...]


# ~2 MiB per block -> ~8 MiB VMEM with 2x in + 2x out double buffers
# (safe under the scoped-VMEM default on v5e/v6e/v7x without overrides).
_TARGET_BLOCK_BYTES = 2 << 20
_MAX_LANE_WIDTH = 2048      # search multiples of 128 up to this width
_MIN_KERNEL_ELEMS = 128     # below one full lane, skip the kernel entirely


def _preferred_sublanes(dtype):
    bits = jnp.dtype(dtype).itemsize * 8
    # 8 for 32-bit, 16 for bf16/f16, 32 for int8/fp8 (full packed vreg rows).
    return max(8, (32 // max(bits, 8)) * 8)


def _pick_lane_width(padded_total):
    """Largest multiple of 128 (<= _MAX_LANE_WIDTH) dividing padded_total."""
    for k in range(_MAX_LANE_WIDTH // 128, 0, -1):
        w = 128 * k
        if padded_total % w == 0:
            return w
    return 128  # unreachable: padded_total is always a multiple of 128


def squeeze_forward(x):
    """Pallas equivalent of Squeeze.forward: x.squeeze().view(-1, last)."""
    # --- static shape logic (glue, mirrors torch.squeeze + view) ---
    squeezed_shape = tuple(d for d in x.shape if d != 1)
    if len(squeezed_shape) == 0:
        # TODO(synk): torch errors on an all-size-1 input (0-d .shape[-1]);
        # we return a (1, 1) result instead of raising.
        squeezed_shape = (1,)
    last = squeezed_shape[-1]
    total = math.prod(x.shape) if x.shape else 1
    rows = total // last                      # torch .view(-1, last)

    # --- tiny inputs: squeeze+view is free metadata; kernel overhead and
    # sub-128-lane masked stores would dominate. ---
    if total < _MIN_KERNEL_ELEMS:
        return jnp.reshape(x, (rows, last))

    # --- lane-dense slab: pad flat length to a multiple of 128 so every
    # kernel path uses full-width (unmasked) vector stores. ---
    pad = (-total) % 128
    flat = jnp.reshape(x, (total,))           # free metadata reshape
    if pad:
        flat = jnp.pad(flat, (0, pad))
    padded = total + pad

    W = _pick_lane_width(padded)              # largest 128-multiple divisor
    R = padded // W
    x2 = jnp.reshape(flat, (R, W))            # free metadata reshape

    itemsize = jnp.dtype(x.dtype).itemsize
    sub = _preferred_sublanes(x.dtype)
    if R <= sub:
        tile_rows = R                          # full-extent sublane dim: legal
    else:
        by_bytes = max(1, _TARGET_BLOCK_BYTES // (W * itemsize))
        tile_rows = max(sub, (min(by_bytes, R) // sub) * sub)

    grid = (pl.cdiv(R, tile_rows),)            # ragged tail handled by Pallas

    out2 = pl.pallas_call(
        _copy_kernel,
        out_shape=jax.ShapeDtypeStruct((R, W), x.dtype),
        grid=grid,
        in_specs=[pl.BlockSpec((tile_rows, W), lambda i: (i, 0))],
        out_specs=pl.BlockSpec((tile_rows, W), lambda i: (i, 0)),
        compiler_params=pltpu.CompilerParams(
            dimension_semantics=("parallel",)),
        cost_estimate=pl.CostEstimate(
            flops=0, transcendentals=0,
            bytes_accessed=2 * padded * itemsize),
    )(x2)

    # Free metadata reshapes (and slice-off of the lane padding, if any) back
    # to the torch semantics.
    out_flat = jnp.reshape(out2, (padded,))
    if pad:
        out_flat = out_flat[:total]
    return jnp.reshape(out_flat, (rows, last))


def _reference(x):
    sq = jnp.squeeze(x)
    if sq.ndim == 0:
        sq = jnp.reshape(sq, (1,))
    return jnp.reshape(sq, (-1, sq.shape[-1]))


if __name__ == "__main__":
    key = jax.random.PRNGKey(0)

    # NCHW = (2, 4, 16, 16): squeeze() is a no-op; view(-1, 16) -> (128, 16).
    # total = 2048 -> lane-dense slab (1, 2048), single full-width block.
    x = jax.random.normal(key, (2, 4, 16, 16), dtype=jnp.float32)
    y = jax.block_until_ready(squeeze_forward(x))
    ref = _reference(x)
    assert y.shape == ref.shape, (y.shape, ref.shape)
    assert jnp.array_equal(y, ref)

    # (2, 1, 16, 16) -> squeeze -> (2, 16, 16) -> view(-1, 16) -> (32, 16).
    x2 = jax.random.normal(jax.random.PRNGKey(1), (2, 1, 16, 16),
                           dtype=jnp.float32)
    y2 = jax.block_until_ready(squeeze_forward(x2))
    ref2 = _reference(x2)
    assert y2.shape == (32, 16)
    assert jnp.array_equal(y2, ref2)

    # bf16 case: total = 3840 -> improved search picks W = 1920 (a multiple
    # of 128 that is not a power of two), dtype-aware 16-row sublanes.
    x3 = jax.random.normal(jax.random.PRNGKey(2), (3, 1, 40, 32),
                           dtype=jnp.bfloat16)
    y3 = jax.block_until_ready(squeeze_forward(x3))
    ref3 = _reference(x3)
    assert y3.shape == (120, 32)
    assert jnp.array_equal(y3, ref3)

    # Non-128-divisible total (5*7*13 = 455): exercises the pad-to-128 path
    # instead of the old masked-store W=last fallback.
    x4 = jax.random.normal(jax.random.PRNGKey(3), (5, 1, 7, 13),
                           dtype=jnp.float32)
    y4 = jax.block_until_ready(squeeze_forward(x4))
    ref4 = _reference(x4)
    assert y4.shape == (35, 13)
    assert jnp.array_equal(y4, ref4)

    # Tiny input: short-circuits the kernel (pure metadata reshape).
    x5 = jax.random.normal(jax.random.PRNGKey(4), (1, 1, 4, 4),
                           dtype=jnp.float32)
    y5 = jax.block_until_ready(squeeze_forward(x5))
    ref5 = _reference(x5)
    assert y5.shape == (4, 4)
    assert jnp.array_equal(y5, ref5)

    print("KERNEL_OK")
</pallas_src>

<mosaic_0001>
module attributes {stable_mosaic.version = 11 : i64} {
  func.func @_copy_kernel(%arg0: i32, %arg1: memref<1x2048xf32, #tpu.memory_space<vmem>>, %arg2: memref<1x2048xf32, #tpu.memory_space<vmem>>) attributes {dimension_semantics = [#tpu.dimension_semantics<parallel>], iteration_bounds = array<i64: 1>, scalar_prefetch = 0 : i64, scratch_operands = 0 : i64, tpu.core_type = #tpu.core_type<tc>, window_params = [{transform_indices = @transform_0, window_bounds = array<i64: 1, 2048>}, {transform_indices = @transform_1, window_bounds = array<i64: 1, 2048>}]} {
    %c0 = arith.constant 0 : index
    %c0_0 = arith.constant 0 : index
    %0 = vector.load %arg1[%c0, %c0_0] : memref<1x2048xf32, #tpu.memory_space<vmem>>, vector<1x2048xf32>
    %c0_1 = arith.constant 0 : index
    %c0_2 = arith.constant 0 : index
    %1 = vector.load %arg2[%c0_1, %c0_2] : memref<1x2048xf32, #tpu.memory_space<vmem>>, vector<1x2048xf32>
    tpu.vector_store %arg2[%c0_1, %c0_2], %0 {strides = array<i32>} : memref<1x2048xf32, #tpu.memory_space<vmem>>, vector<1x2048xf32>,
    return
  }
  func.func @transform_0(%arg0: i32) -> (i32, i32) {
    %c0_i32 = arith.constant 0 : i32
    %c0_i32_0 = arith.constant 0 : i32
    return %arg0, %c0_i32 : i32, i32
  }
  func.func @transform_1(%arg0: i32) -> (i32, i32) {
    %c0_i32 = arith.constant 0 : i32
    %c0_i32_0 = arith.constant 0 : i32
    return %arg0, %c0_i32 : i32, i32
  }
}

</mosaic_0001>

<llo_original>
// kernel: tpu_custom_call.1
$region0: #{tpu_custom_call.1}
  #allocation0 [shape = 'u32[]', space=smem, size = 0x4, offset = 0x4, fixed_abs, tag = 'smem constant byte address 0x4 - core index']
  #allocation1 [shape = 'u32[144,128]{1,0:T(1,128)}', space=vmem, size = 0x12000, scoped, tag = 'internal scratch']
  %s0 = inlined_call_operand.hbm [shape: f32[1,2048], index: 0, kind: input, shape index: {}]
  %s1 = inlined_call_operand.hbm [shape: f32[1,2048], index: 1, kind: output, shape index: {}]
  %s2 = sld [smem:[#allocation0]]
  $region18: #{tpu_custom_call.1} parent=0
    _
  %s4 = ssub.s32 1, %s2
  %s5 = scalar_select 0, %s4, %s2
  $region1: #{tpu_custom_call.1} parent=0
    #allocation2 [shape = 'u8[8192]{0}', space=vmem, size = 0x2000, scoped, tag = 'input window, operand 0, single buffered']
    #allocation3 [shape = 's32[1]{0}', space=sflag, size = 0x4, scoped, tag = 'scoped memory for tpu_custom_call.1']
    #allocation4 [shape = 's32[1]{0}', space=sflag, size = 0x4, scoped, tag = 'scoped memory for tpu_custom_call.1']
    #allocation5 [shape = 'u8[8192]{0}', space=vmem, size = 0x2000, scoped, tag = 'output window, operand 0, single buffered']
    %6 = vsyncpa [#allocation3], 0
    %7 = vsyncpa [#allocation4], 0
    // Predicated region
    $region2: #{tpu_custom_call.1} parent=1 // pred_check
      _
    $region3: #{tpu_custom_call.1} parent=1 // pred_check_branch
      %9 = sbr.rel (0) target = $region5
    $region4: #{tpu_custom_call.1} parent=1 // pred_region
      %s11 = ssub.s32 256, 256
      %12 = vsyncadd [#allocation3], %s11
      %s14 = sshll.u32 [#allocation2], 4
      %s15 = int_to_ptr.vmem [resolvable:$true] %s14
      %17 = dma.hbm_to_vmem [thread:$0]  %s0, 256, %s15, [#allocation3]
    $region5: #{tpu_custom_call.1} parent=1 // pred_fallthru
      _
    // Predicated region
    $region6: #{tpu_custom_call.1} parent=1 // pred_check
      _
    $region7: #{tpu_custom_call.1} parent=1 // pred_check_branch
      %19 = sbr.rel (0) target = $region9
    $region8: #{tpu_custom_call.1} parent=1 // pred_region
      %20 = dma.done [#allocation3], 256
    $region9: #{tpu_custom_call.1} parent=1 // pred_fallthru
      _
    %v21 = vld [vmem:[#allocation2] sm:$0xff]
    %v22 = vld [vmem:[#allocation2 + $0x8] sm:$0xff]
    %23 = vst [vmem:[#allocation5] sm:$0xff] %v21
    %24 = vst [vmem:[#allocation5 + $0x8] sm:$0xff] %v22
    // Predicated region
    $region10: #{tpu_custom_call.1} parent=1 // pred_check
      _
    $region11: #{tpu_custom_call.1} parent=1 // pred_check_branch
      %26 = sbr.rel (0) target = $region13
    $region12: #{tpu_custom_call.1} parent=1 // pred_region
      %s28 = ssub.s32 256, 256
      %29 = vsyncadd [#allocation4], %s28
      %s31 = sshll.u32 [#allocation5], 4
      %s32 = int_to_ptr.vmem [resolvable:$true] %s31
      %34 = dma.vmem_to_hbm [thread:$0]  %s32, 256, %s1, [#allocation4]
    $region13: #{tpu_custom_call.1} parent=1 // pred_fallthru
      _
    // Predicated region
    $region14: #{tpu_custom_call.1} parent=1 // pred_check
      _
    $region15: #{tpu_custom_call.1} parent=1 // pred_check_branch
      %36 = sbr.rel (0) target = $region17
    $region16: #{tpu_custom_call.1} parent=1 // pred_region
      %37 = dma.done [#allocation4], 256
    $region17: #{tpu_custom_call.1} parent=1 // pred_fallthru
      _
    %38 = vsyncpa [#allocation3], 1
    %39 = vsyncpa [#allocation4], 1

</llo_original>
